<compile_context>
chip_gen: v7x
topology: tpu7x:2x2x1
jax: 0.10.0
libtpu: 0.0.40
codegen_flags: <defaults>
</compile_context>

<pallas_src>
import math
import functools

import jax
import jax.numpy as jnp
from jax.experimental import pallas as pl
from jax.experimental.pallas import tpu as pltpu


# ---------------------------------------------------------------------------
# Pallas kernels (weights arrive transposed: [in_p, TN])
# ---------------------------------------------------------------------------
def _noisy_train_kernel(x_ref, wmu_ref, wsig_ref, ein_ref, eout_ref,
                        b_ref, o_ref):
    # Factored noise outer product, built directly in the streamed dtype
    # (bf16 VALU on v6e/v7x; Mosaic widens on v5e).
    #   [in_p,1] * [1,TN] -> [in_p,TN]
    w_eps = ein_ref[...] * eout_ref[...]
    w = wmu_ref[...] + wsig_ref[...] * w_eps                  # [in_p, TN]

    # Canonical [TB,K] x [K,TN] matmul — feeds the MXU, f32 accumulation.
    y = jnp.dot(x_ref[...], w, preferred_element_type=jnp.float32)
    o_ref[...] = (y + b_ref[...]).astype(o_ref.dtype)         # bias kept f32


def _noisy_eval_kernel(x_ref, wmu_ref, b_ref, o_ref):
    y = jnp.dot(x_ref[...], wmu_ref[...], preferred_element_type=jnp.float32)
    o_ref[...] = (y + b_ref[...]).astype(o_ref.dtype)


# ---------------------------------------------------------------------------
# Wrapper helpers
# ---------------------------------------------------------------------------
def _round_up(x, m):
    return (x + m - 1) // m * m


def _pad2(a, rows, cols):
    pr, pc = rows - a.shape[0], cols - a.shape[1]
    if pr or pc:
        a = jnp.pad(a, ((0, pr), (0, pc)))
    return a


def _choose_tn(in_p, out_128, itemsize, training):
    """Largest out-tile whose double-buffered weight streams + in-kernel
    W_eff temporaries fit a conservative ~12 MiB budget (v5e/v7x safe)."""
    budget = 12 * 1024 * 1024
    n_w = 2 if training else 1
    for tn in (512, 256, 128):
        if tn > out_128:
            continue
        stream = n_w * 2 * tn * in_p * itemsize          # 2-deep pipeline
        temps = (2 * tn * in_p * itemsize) if training else 0
        if stream + temps <= budget:
            return tn
    return 128


def _vmem_estimate(tb, tn, in_p, itemsize, training, out_itemsize):
    n_w = 2 if training else 1
    x_b = 2 * tb * in_p * itemsize
    w_b = n_w * 2 * tn * in_p * itemsize
    o_b = 2 * tb * tn * out_itemsize
    tmp = (2 * tn * in_p * itemsize) if training else 0
    small = 4 * (in_p + 2 * tn) * 4
    return x_b + w_b + o_b + tmp + small


# ---------------------------------------------------------------------------
# Public wrapper
# ---------------------------------------------------------------------------
def noisy_linear(x, weight_mu, weight_sigma, eps_in, eps_out,
                 bias_mu, bias_sigma, *, training=True,
                 compute_dtype=jnp.float32):
    """Pallas-backed NoisyLinear.forward.

    x: [B, in_features]; weight_*: [out_features, in_features];
    eps_in: [in_features]; eps_out: [out_features]; bias_*: [out_features].
    weight_epsilon == outer(eps_out, eps_in), bias_epsilon == eps_out,
    exactly as produced by the module's reset_noise().

    compute_dtype: dtype streamed from HBM and used to build W_eff on the VPU
    (f32 = bit-faithful / v5e-friendly, bf16 = ~2x less HBM traffic on all
    generations, native VALU on v6e/v7x). Accumulation is always f32.
    """
    B, in_f = x.shape
    out_f = weight_mu.shape[0]
    out_dtype = x.dtype
    itemsize = jnp.dtype(compute_dtype).itemsize

    # ---- tile / padding selection -----------------------------------------
    in_p = _round_up(in_f, 128)
    out_128 = _round_up(out_f, 128)
    TN = _choose_tn(in_p, out_128, itemsize, training)
    out_p = _round_up(out_f, TN)
    # Guarantee >=2 out-feature grid steps when possible so both v7x TCs work.
    if out_p // TN < 2 and out_128 >= 256:
        TN = _round_up(out_128 // 2, 128)
        out_p = _round_up(out_f, TN)

    B_p = _round_up(B, 8)
    if B_p > 256:
        TB = 256
        B_p = _round_up(B, TB)
    else:
        TB = B_p
    grid = (B_p // TB, out_p // TN)

    # ---- operand preparation (one-time XLA work, outside the kernel) ------
    x_p = _pad2(x.astype(compute_dtype), B_p, in_p)
    # Store weights transposed [in, out] so the kernel matmul is [B,K]x[K,TN].
    wmu_p = _pad2(weight_mu.T.astype(compute_dtype), in_p, out_p)

    if training:
        wsig_p = _pad2(weight_sigma.T.astype(compute_dtype), in_p, out_p)
        ein_col = jnp.pad(eps_in.astype(compute_dtype),
                          (0, in_p - in_f)).reshape(in_p, 1)
        eout_row = jnp.pad(eps_out.astype(compute_dtype),
                           (0, out_p - out_f)).reshape(1, out_p)
        # Pre-fused bias (f32), computed once in the wrapper.
        b_eff = (bias_mu.astype(jnp.float32)
                 + bias_sigma.astype(jnp.float32) * eps_out.astype(jnp.float32))
    else:
        b_eff = bias_mu.astype(jnp.float32)
    b_p = jnp.pad(b_eff, (0, out_p - out_f)).reshape(1, out_p)

    # ---- specs --------------------------------------------------------------
    x_spec = pl.BlockSpec((TB, in_p), lambda i, j: (i, 0))
    w_spec = pl.BlockSpec((in_p, TN), lambda i, j: (0, j))
    ein_spec = pl.BlockSpec((in_p, 1), lambda i, j: (0, 0))
    eout_spec = pl.BlockSpec((1, TN), lambda i, j: (0, j))
    b_spec = pl.BlockSpec((1, TN), lambda i, j: (0, j))
    out_spec = pl.BlockSpec((TB, TN), lambda i, j: (i, j))

    est = _vmem_estimate(TB, TN, in_p, itemsize, training,
                         jnp.dtype(out_dtype).itemsize)
    vmem_limit = min(max(int(1.5 * est) + (2 << 20), 16 << 20), 56 << 20)
    cparams = pltpu.CompilerParams(
        dimension_semantics=("parallel", "parallel"),
        vmem_limit_bytes=vmem_limit)
    # TODO(synk): for in_features >> 8K add a K ("arbitrary") grid axis with an
    # f32 accumulator scratch instead of holding the full K slab per step.

    if training:
        y_p = pl.pallas_call(
            _noisy_train_kernel,
            out_shape=jax.ShapeDtypeStruct((B_p, out_p), out_dtype),
            grid=grid,
            in_specs=[x_spec, w_spec, w_spec, ein_spec, eout_spec, b_spec],
            out_specs=out_spec,
            compiler_params=cparams,
        )(x_p, wmu_p, wsig_p, ein_col, eout_row, b_p)
    else:
        y_p = pl.pallas_call(
            _noisy_eval_kernel,
            out_shape=jax.ShapeDtypeStruct((B_p, out_p), out_dtype),
            grid=grid,
            in_specs=[x_spec, w_spec, b_spec],
            out_specs=out_spec,
            compiler_params=cparams,
        )(x_p, wmu_p, b_p)

    return y_p[:B, :out_f]


# ---------------------------------------------------------------------------
# Parameter / noise setup (plain-JAX glue, deterministic).
# ---------------------------------------------------------------------------
def _scale_noise(key, size):
    x = jax.random.normal(key, (size,), dtype=jnp.float32)
    return jnp.sign(x) * jnp.sqrt(jnp.abs(x))


def init_noisy_linear(key, in_features, out_features, std_init=0.5):
    k_wmu, k_bmu, k_ein, k_eout = jax.random.split(key, 4)
    mu_range = 1.0 / math.sqrt(in_features)

    weight_mu = jax.random.uniform(
        k_wmu, (out_features, in_features), jnp.float32, -mu_range, mu_range)
    weight_sigma = jnp.full((out_features, in_features),
                            std_init / math.sqrt(in_features), jnp.float32)
    bias_mu = jax.random.uniform(
        k_bmu, (out_features,), jnp.float32, -mu_range, mu_range)
    bias_sigma = jnp.full((out_features,),
                          std_init / math.sqrt(out_features), jnp.float32)

    # reset_noise(): keep the *factored* noise vectors; the kernel rebuilds
    # eps_out ⊗ eps_in on the fly (saves a full [out,in] HBM stream).
    eps_in = _scale_noise(k_ein, in_features)
    eps_out = _scale_noise(k_eout, out_features)

    return dict(weight_mu=weight_mu, weight_sigma=weight_sigma,
                bias_mu=bias_mu, bias_sigma=bias_sigma,
                eps_in=eps_in, eps_out=eps_out)


def noisy_linear_ref(x, p, training=True):
    """Pure-JAX reference mirroring the PyTorch forward exactly."""
    weight_epsilon = jnp.outer(p["eps_out"], p["eps_in"])
    bias_epsilon = p["eps_out"]
    if training:
        w = p["weight_mu"] + p["weight_sigma"] * weight_epsilon
        b = p["bias_mu"] + p["bias_sigma"] * bias_epsilon
    else:
        w, b = p["weight_mu"], p["bias_mu"]
    return x @ w.T + b


def _args(x, p):
    return (x, p["weight_mu"], p["weight_sigma"], p["eps_in"], p["eps_out"],
            p["bias_mu"], p["bias_sigma"])


if __name__ == "__main__":
    key = jax.random.PRNGKey(0)
    k_params, k_x, k_params2, k_x2 = jax.random.split(key, 4)

    # --- small shapes consistent with the module ---------------------------
    batch, in_features, out_features = 8, 32, 64
    params = init_noisy_linear(k_params, in_features, out_features)
    x = jax.random.normal(k_x, (batch, in_features), dtype=jnp.float32)

    # Training path, f32 compute (bit-faithful to the PyTorch module).
    run_train = jax.jit(functools.partial(noisy_linear, training=True,
                                          compute_dtype=jnp.float32))
    y = run_train(*_args(x, params))
    jax.block_until_ready(y)
    y_ref = noisy_linear_ref(x, params, training=True)
    assert y.shape == (batch, out_features)
    assert jnp.allclose(y, y_ref, atol=1e-5, rtol=1e-5), "train(f32) mismatch"

    # Training path, bf16 streaming/compute (perf mode) — looser tolerance.
    run_bf16 = jax.jit(functools.partial(noisy_linear, training=True,
                                         compute_dtype=jnp.bfloat16))
    y16 = run_bf16(*_args(x, params))
    jax.block_until_ready(y16)
    assert jnp.allclose(y16, y_ref, atol=5e-2, rtol=5e-2), "train(bf16) mismatch"

    # Eval path: specialized kernel, only W_mu / b_mu stream from HBM.
    run_eval = jax.jit(functools.partial(noisy_linear, training=False,
                                         compute_dtype=jnp.float32))
    y_eval = run_eval(*_args(x, params))
    jax.block_until_ready(y_eval)
    assert jnp.allclose(y_eval, noisy_linear_ref(x, params, training=False),
                        atol=1e-5, rtol=1e-5), "eval mismatch"

    # --- larger hidden layer: exercises the multi-step parallel grid -------
    batch2, in2, out2 = 64, 512, 512
    params2 = init_noisy_linear(k_params2, in2, out2)
    x2 = jax.random.normal(k_x2, (batch2, in2), dtype=jnp.float32)
    y2 = run_train(*_args(x2, params2))
    jax.block_until_ready(y2)
    y2_ref = noisy_linear_ref(x2, params2, training=True)
    assert jnp.allclose(y2, y2_ref, atol=1e-4, rtol=1e-4), "train(512) mismatch"

    print("KERNEL_OK")
</pallas_src>

<mosaic_0001>
module attributes {stable_mosaic.version = 11 : i64} {
  func.func @_noisy_train_kernel(%arg0: i32, %arg1: i32, %arg2: memref<8x128xf32, #tpu.memory_space<vmem>>, %arg3: memref<128x128xf32, #tpu.memory_space<vmem>>, %arg4: memref<128x128xf32, #tpu.memory_space<vmem>>, %arg5: memref<128x1xf32, #tpu.memory_space<vmem>>, %arg6: memref<1x128xf32, #tpu.memory_space<vmem>>, %arg7: memref<1x128xf32, #tpu.memory_space<vmem>>, %arg8: memref<8x128xf32, #tpu.memory_space<vmem>>) attributes {dimension_semantics = [#tpu.dimension_semantics<parallel>, #tpu.dimension_semantics<parallel>], iteration_bounds = array<i64: 1, 1>, scalar_prefetch = 0 : i64, scratch_operands = 0 : i64, tpu.core_type = #tpu.core_type<tc>, window_params = [{transform_indices = @transform_0, window_bounds = array<i64: 8, 128>}, {transform_indices = @transform_1, window_bounds = array<i64: 128, 128>}, {transform_indices = @transform_2, window_bounds = array<i64: 128, 128>}, {pipeline_mode = #tpu.pipeline_mode<synchronous>, transform_indices = @transform_3, window_bounds = array<i64: 128, 1>}, {transform_indices = @transform_4, window_bounds = array<i64: 1, 128>}, {transform_indices = @transform_5, window_bounds = array<i64: 1, 128>}, {transform_indices = @transform_6, window_bounds = array<i64: 8, 128>}]} {
    %c0 = arith.constant 0 : index
    %c0_0 = arith.constant 0 : index
    %0 = vector.load %arg5[%c0, %c0_0] : memref<128x1xf32, #tpu.memory_space<vmem>>, vector<128x1xf32>
    %c0_1 = arith.constant 0 : index
    %c0_2 = arith.constant 0 : index
    %1 = vector.load %arg6[%c0_1, %c0_2] : memref<1x128xf32, #tpu.memory_space<vmem>>, vector<1x128xf32>
    %2 = vector.broadcast %0 : vector<128x1xf32> to vector<128x128xf32>
    %3 = vector.broadcast %1 : vector<1x128xf32> to vector<128x128xf32>
    %4 = arith.mulf %2, %3 : vector<128x128xf32>
    %c0_3 = arith.constant 0 : index
    %c0_4 = arith.constant 0 : index
    %5 = vector.load %arg3[%c0_3, %c0_4] : memref<128x128xf32, #tpu.memory_space<vmem>>, vector<128x128xf32>
    %c0_5 = arith.constant 0 : index
    %c0_6 = arith.constant 0 : index
    %6 = vector.load %arg4[%c0_5, %c0_6] : memref<128x128xf32, #tpu.memory_space<vmem>>, vector<128x128xf32>
    %7 = arith.mulf %6, %4 : vector<128x128xf32>
    %8 = arith.addf %5, %7 : vector<128x128xf32>
    %c0_7 = arith.constant 0 : index
    %c0_8 = arith.constant 0 : index
    %9 = vector.load %arg2[%c0_7, %c0_8] : memref<8x128xf32, #tpu.memory_space<vmem>>, vector<8x128xf32>
    %cst = arith.constant dense<0.000000e+00> : vector<8x128xf32>
    %10 = tpu.matmul %9, %8, %cst {dimension_numbers = #tpu.dot_dimension_numbers<[1], [0], [0], [1], [0, 0, 1, 1], [], []>} : vector<8x128xf32>, vector<128x128xf32>, vector<8x128xf32> -> vector<8x128xf32>
    %c0_9 = arith.constant 0 : index
    %c0_10 = arith.constant 0 : index
    %11 = vector.load %arg7[%c0_9, %c0_10] : memref<1x128xf32, #tpu.memory_space<vmem>>, vector<1x128xf32>
    %12 = vector.broadcast %11 : vector<1x128xf32> to vector<8x128xf32>
    %13 = arith.addf %10, %12 : vector<8x128xf32>
    %c0_11 = arith.constant 0 : index
    %c0_12 = arith.constant 0 : index
    %14 = vector.load %arg8[%c0_11, %c0_12] : memref<8x128xf32, #tpu.memory_space<vmem>>, vector<8x128xf32>
    tpu.vector_store %arg8[%c0_11, %c0_12], %13 {strides = array<i32>} : memref<8x128xf32, #tpu.memory_space<vmem>>, vector<8x128xf32>,
    return
  }
  func.func @transform_0(%arg0: i32, %arg1: i32) -> (i32, i32) {
    %c0_i32 = arith.constant 0 : i32
    %c0_i32_0 = arith.constant 0 : i32
    return %arg0, %c0_i32 : i32, i32
  }
  func.func @transform_1(%arg0: i32, %arg1: i32) -> (i32, i32) {
    %c0_i32 = arith.constant 0 : i32
    %c0_i32_0 = arith.constant 0 : i32
    return %c0_i32, %arg1 : i32, i32
  }
  func.func @transform_2(%arg0: i32, %arg1: i32) -> (i32, i32) {
    %c0_i32 = arith.constant 0 : i32
    %c0_i32_0 = arith.constant 0 : i32
    return %c0_i32, %arg1 : i32, i32
  }
  func.func @transform_3(%arg0: i32, %arg1: i32) -> (i32, i32) {
    %c0_i32 = arith.constant 0 : i32
    %c0_i32_0 = arith.constant 0 : i32
    %c0_i32_1 = arith.constant 0 : i32
    return %c0_i32, %c0_i32_0 : i32, i32
  }
  func.func @transform_4(%arg0: i32, %arg1: i32) -> (i32, i32) {
    %c0_i32 = arith.constant 0 : i32
    %c0_i32_0 = arith.constant 0 : i32
    return %c0_i32, %arg1 : i32, i32
  }
  func.func @transform_5(%arg0: i32, %arg1: i32) -> (i32, i32) {
    %c0_i32 = arith.constant 0 : i32
    %c0_i32_0 = arith.constant 0 : i32
    return %c0_i32, %arg1 : i32, i32
  }
  func.func @transform_6(%arg0: i32, %arg1: i32) -> (i32, i32) {
    %c0_i32 = arith.constant 0 : i32
    return %arg0, %arg1 : i32, i32
  }
}

</mosaic_0001>

<llo_original>
// kernel: noisy_linear.1
$region0: #{noisy_linear.1}
  #allocation0 [shape = 'u32[]', space=smem, size = 0x4, offset = 0x4, fixed_abs, tag = 'smem constant byte address 0x4 - core index']
  #allocation1 [shape = 'u32[144,128]{1,0:T(1,128)}', space=vmem, size = 0x12000, scoped, tag = 'internal scratch']
  %s0 = inlined_call_operand.vmem [shape: f32[8,128], index: 0, kind: input, shape index: {}]
  %s1 = inlined_call_operand.vmem [shape: f32[128,128], index: 1, kind: input, shape index: {}]
  %s2 = inlined_call_operand.vmem [shape: f32[128,128], index: 2, kind: input, shape index: {}]
  %s3 = inlined_call_operand.vmem [shape: f32[128,1], index: 3, kind: input, shape index: {}]
  %s4 = inlined_call_operand.vmem [shape: f32[1,128], index: 4, kind: input, shape index: {}]
  %s5 = inlined_call_operand.vmem [shape: f32[1,128], index: 5, kind: input, shape index: {}]
  %s6 = inlined_call_operand.hbm [shape: f32[8,128], index: 6, kind: output, shape index: {}]
  %s7 = sld [smem:[#allocation0]]
  $region34: #{noisy_linear.1} parent=0
    _
  %s9 = ssub.s32 1, %s7
  %s10 = scalar_select 0, %s9, %s7
  $region1: #{noisy_linear.1} parent=0
    #allocation2 [shape = 'u8[4096]{0}', space=vmem, size = 0x1000, scoped, tag = 'output window, operand 0, single buffered']
    #allocation3 [shape = 's32[1]{0}', space=sflag, size = 0x4, scoped, tag = 'scoped memory for noisy_linear.1']
    %11 = vsyncpa [#allocation3], 0
    // Predicated region
    $region2: #{noisy_linear.1} parent=1 // pred_check
      _
    $region3: #{noisy_linear.1} parent=1 // pred_check_branch
      %13 = sbr.rel (0) target = $region5
    $region4: #{noisy_linear.1} parent=1 // pred_region
      _
    $region5: #{noisy_linear.1} parent=1 // pred_fallthru
      _
    // Predicated region
    $region6: #{noisy_linear.1} parent=1 // pred_check
      _
    $region7: #{noisy_linear.1} parent=1 // pred_check_branch
      %15 = sbr.rel (0) target = $region9
    $region8: #{noisy_linear.1} parent=1 // pred_region
      _
    $region9: #{noisy_linear.1} parent=1 // pred_fallthru
      _
    // Predicated region
    $region10: #{noisy_linear.1} parent=1 // pred_check
      _
    $region11: #{noisy_linear.1} parent=1 // pred_check_branch
      %17 = sbr.rel (0) target = $region13
    $region12: #{noisy_linear.1} parent=1 // pred_region
      _
    $region13: #{noisy_linear.1} parent=1 // pred_fallthru
      _
    // Predicated region
    $region14: #{noisy_linear.1} parent=1 // pred_check
      _
    $region15: #{noisy_linear.1} parent=1 // pred_check_branch
      %19 = sbr.rel (0) target = $region17
    $region16: #{noisy_linear.1} parent=1 // pred_region
      _
    $region17: #{noisy_linear.1} parent=1 // pred_fallthru
      _
    // Predicated region
    $region18: #{noisy_linear.1} parent=1 // pred_check
      _
    $region19: #{noisy_linear.1} parent=1 // pred_check_branch
      %21 = sbr.rel (0) target = $region21
    $region20: #{noisy_linear.1} parent=1 // pred_region
      _
    $region21: #{noisy_linear.1} parent=1 // pred_fallthru
      _
    // Predicated region
    $region22: #{noisy_linear.1} parent=1 // pred_check
      _
    $region23: #{noisy_linear.1} parent=1 // pred_check_branch
      %23 = sbr.rel (0) target = $region25
    $region24: #{noisy_linear.1} parent=1 // pred_region
      _
    $region25: #{noisy_linear.1} parent=1 // pred_fallthru
      _
    %v24 = vld [vmem:[%s3] sm:$0xff]
    %v25 = vld [vmem:[%s3 + $0x8] sm:$0xff]
    %v26 = vld [vmem:[%s3 + $0x10] sm:$0xff]
    %v27 = vld [vmem:[%s3 + $0x18] sm:$0xff]
    %v28 = vld [vmem:[%s3 + $0x20] sm:$0xff]
    %v29 = vld [vmem:[%s3 + $0x28] sm:$0xff]
    %v30 = vld [vmem:[%s3 + $0x30] sm:$0xff]
    %v31 = vld [vmem:[%s3 + $0x38] sm:$0xff]
    %v32 = vld [vmem:[%s3 + $0x40] sm:$0xff]
    %v33 = vld [vmem:[%s3 + $0x48] sm:$0xff]
    %v34 = vld [vmem:[%s3 + $0x50] sm:$0xff]
    %v35 = vld [vmem:[%s3 + $0x58] sm:$0xff]
    %v36 = vld [vmem:[%s3 + $0x60] sm:$0xff]
    %v37 = vld [vmem:[%s3 + $0x68] sm:$0xff]
    %v38 = vld [vmem:[%s3 + $0x70] sm:$0xff]
    %v39 = vld [vmem:[%s3 + $0x78] sm:$0xff]
    %v40 = vld [vmem:[%s4] sm:$0x1]
    %42 = vset.pattern.permute.xlu0 0
    %43 = vperm.xlu0 %42, %v24
    %v44 = vpop.permute.xlu0 %43
    %47 = vset.pattern.permute.xlu0 0
    %48 = vperm.xlu0 %47, %v25
    %v49 = vpop.permute.xlu0 %48
    %52 = vset.pattern.permute.xlu0 0
    %53 = vperm.xlu0 %52, %v26
    %v54 = vpop.permute.xlu0 %53
    %57 = vset.pattern.permute.xlu0 0
    %58 = vperm.xlu0 %57, %v27
    %v59 = vpop.permute.xlu0 %58
    %62 = vset.pattern.permute.xlu0 0
    %63 = vperm.xlu0 %62, %v28
    %v64 = vpop.permute.xlu0 %63
    %67 = vset.pattern.permute.xlu0 0
    %68 = vperm.xlu0 %67, %v29
    %v69 = vpop.permute.xlu0 %68
    %72 = vset.pattern.permute.xlu0 0
    %73 = vperm.xlu0 %72, %v30
    %v74 = vpop.permute.xlu0 %73
    %77 = vset.pattern.permute.xlu0 0
    %78 = vperm.xlu0 %77, %v31
    %v79 = vpop.permute.xlu0 %78
    %82 = vset.pattern.permute.xlu0 0
    %83 = vperm.xlu0 %82, %v32
    %v84 = vpop.permute.xlu0 %83
    %87 = vset.pattern.permute.xlu0 0
    %88 = vperm.xlu0 %87, %v33
    %v89 = vpop.permute.xlu0 %88
    %92 = vset.pattern.permute.xlu0 0
    %93 = vperm.xlu0 %92, %v34
    %v94 = vpop.permute.xlu0 %93
    %97 = vset.pattern.permute.xlu0 0
    %98 = vperm.xlu0 %97, %v35
    %v99 = vpop.permute.xlu0 %98
    %102 = vset.pattern.permute.xlu0 0
    %103 = vperm.xlu0 %102, %v36
    %v104 = vpop.permute.xlu0 %103
    %107 = vset.pattern.permute.xlu0 0
    %108 = vperm.xlu0 %107, %v37
    %v109 = vpop.permute.xlu0 %108
    %112 = vset.pattern.permute.xlu0 0
    %113 = vperm.xlu0 %112, %v38
    %v114 = vpop.permute.xlu0 %113
    %117 = vset.pattern.permute.xlu0 0
    %118 = vperm.xlu0 %117, %v39
    %v119 = vpop.permute.xlu0 %118
    %v122 = vlaneseq
    %v123 = vshrl.u32 %v122, 7
    %v124 = vsub.s32 0, %v123
    %v125 = vrot.slane %v40, %v124
    %v127 = vmul.f32 %v44, %v125
    %v128 = vmul.f32 %v49, %v125
    %v129 = vmul.f32 %v54, %v125
    %v130 = vmul.f32 %v59, %v125
    %v131 = vmul.f32 %v64, %v125
    %v132 = vmul.f32 %v69, %v125
    %v133 = vmul.f32 %v74, %v125
    %v134 = vmul.f32 %v79, %v125
    %v135 = vmul.f32 %v84, %v125
    %v136 = vmul.f32 %v89, %v125
    %v137 = vmul.f32 %v94, %v125
    %v138 = vmul.f32 %v99, %v125
    %v139 = vmul.f32 %v104, %v125
    %v140 = vmul.f32 %v109, %v125
    %v141 = vmul.f32 %v114, %v125
    %v142 = vmul.f32 %v119, %v125
    %v143 = vld [vmem:[%s1] sm:$0xff]
    %v144 = vld [vmem:[%s1 + $0x8] sm:$0xff]
    %v145 = vld [vmem:[%s1 + $0x10] sm:$0xff]
    %v146 = vld [vmem:[%s1 + $0x18] sm:$0xff]
    %v147 = vld [vmem:[%s1 + $0x20] sm:$0xff]
    %v148 = vld [vmem:[%s1 + $0x28] sm:$0xff]
    %v149 = vld [vmem:[%s1 + $0x30] sm:$0xff]
    %v150 = vld [vmem:[%s1 + $0x38] sm:$0xff]
    %v151 = vld [vmem:[%s1 + $0x40] sm:$0xff]
    %v152 = vld [vmem:[%s1 + $0x48] sm:$0xff]
    %v153 = vld [vmem:[%s1 + $0x50] sm:$0xff]
    %v154 = vld [vmem:[%s1 + $0x58] sm:$0xff]
    %v155 = vld [vmem:[%s1 + $0x60] sm:$0xff]
    %v156 = vld [vmem:[%s1 + $0x68] sm:$0xff]
    %v157 = vld [vmem:[%s1 + $0x70] sm:$0xff]
    %v158 = vld [vmem:[%s1 + $0x78] sm:$0xff]
    %v159 = vld [vmem:[%s2] sm:$0xff]
    %v160 = vld [vmem:[%s2 + $0x8] sm:$0xff]
    %v161 = vld [vmem:[%s2 + $0x10] sm:$0xff]
    %v162 = vld [vmem:[%s2 + $0x18] sm:$0xff]
    %v163 = vld [vmem:[%s2 + $0x20] sm:$0xff]
    %v164 = vld [vmem:[%s2 + $0x28] sm:$0xff]
    %v165 = vld [vmem:[%s2 + $0x30] sm:$0xff]
    %v166 = vld [vmem:[%s2 + $0x38] sm:$0xff]
    %v167 = vld [vmem:[%s2 + $0x40] sm:$0xff]
    %v168 = vld [vmem:[%s2 + $0x48] sm:$0xff]
    %v169 = vld [vmem:[%s2 + $0x50] sm:$0xff]
    %v170 = vld [vmem:[%s2 + $0x58] sm:$0xff]
    %v171 = vld [vmem:[%s2 + $0x60] sm:$0xff]
    %v172 = vld [vmem:[%s2 + $0x68] sm:$0xff]
    %v173 = vld [vmem:[%s2 + $0x70] sm:$0xff]
    %v174 = vld [vmem:[%s2 + $0x78] sm:$0xff]
    %v175 = vmul.f32 %v159, %v127
    %v176 = vmul.f32 %v160, %v128
    %v177 = vmul.f32 %v161, %v129
    %v178 = vmul.f32 %v162, %v130
    %v179 = vmul.f32 %v163, %v131
    %v180 = vmul.f32 %v164, %v132
    %v181 = vmul.f32 %v165, %v133
    %v182 = vmul.f32 %v166, %v134
    %v183 = vmul.f32 %v167, %v135
    %v184 = vmul.f32 %v168, %v136
    %v185 = vmul.f32 %v169, %v137
    %v186 = vmul.f32 %v170, %v138
    %v187 = vmul.f32 %v171, %v139
    %v188 = vmul.f32 %v172, %v140
    %v189 = vmul.f32 %v173, %v141
    %v190 = vmul.f32 %v174, %v142
    %v191 = vadd.f32 %v143, %v175
    %v192 = vadd.f32 %v144, %v176
    %v193 = vadd.f32 %v145, %v177
    %v194 = vadd.f32 %v146, %v178
    %v195 = vadd.f32 %v147, %v179
    %v196 = vadd.f32 %v148, %v180
    %v197 = vadd.f32 %v149, %v181
    %v198 = vadd.f32 %v150, %v182
    %v199 = vadd.f32 %v151, %v183
    %v200 = vadd.f32 %v152, %v184
    %v201 = vadd.f32 %v153, %v185
    %v202 = vadd.f32 %v154, %v186
    %v203 = vadd.f32 %v155, %v187
    %v204 = vadd.f32 %v156, %v188
    %v205 = vadd.f32 %v157, %v189
    %v206 = vadd.f32 %v158, %v190
    %v207 = vld [vmem:[%s0] sm:$0xff]
    %v208 = vld [vmem:[%s5] sm:$0x1]
    %v210 = vlaneseq
    %v211 = vshrl.u32 %v210, 7
    %v212 = vsub.s32 0, %v211
    %v213 = vrot.slane %v208, %v212
    %215 = vmatprep.subr.mxu0 0.0
    %216 = vmatpush1.msra.mxu0 %v191
    %217 = vmatprep.subr.mxu0 0.0
    %218 = vmatpush1.msra.mxu0 %v192
    %219 = vmatprep.subr.mxu0 0.0
    %220 = vmatpush1.msra.mxu0 %v193
    %221 = vmatprep.subr.mxu0 0.0
    %222 = vmatpush1.msra.mxu0 %v194
    %223 = vmatprep.subr.mxu0 0.0
    %224 = vmatpush1.msra.mxu0 %v195
    %225 = vmatprep.subr.mxu0 0.0
    %226 = vmatpush1.msra.mxu0 %v196
    %227 = vmatprep.subr.mxu0 0.0
    %228 = vmatpush1.msra.mxu0 %v197
    %229 = vmatprep.subr.mxu0 0.0
    %230 = vmatpush1.msra.mxu0 %v198
    %231 = vmatprep.subr.mxu0 0.0
    %232 = vmatpush1.msra.mxu0 %v199
    %233 = vmatprep.subr.mxu0 0.0
    %234 = vmatpush1.msra.mxu0 %v200
    %235 = vmatprep.subr.mxu0 0.0
    %236 = vmatpush1.msra.mxu0 %v201
    %237 = vmatprep.subr.mxu0 0.0
    %238 = vmatpush1.msra.mxu0 %v202
    %239 = vmatprep.subr.mxu0 0.0
    %240 = vmatpush1.msra.mxu0 %v203
    %241 = vmatprep.subr.mxu0 0.0
    %242 = vmatpush1.msra.mxu0 %v204
    %243 = vmatprep.subr.mxu0 0.0
    %244 = vmatpush1.msra.mxu0 %v205
    %245 = vmatprep.subr.mxu0 0.0
    %246 = vmatpush1.msra.mxu0 %v206
    %247 = vmatprep.subr.mxu0 0.0
    %248 = vmatpush1.msra.mxu0 0.0
    %249 = vmatprep.subr.mxu0 0.0
    %250 = vmatpush1.msra.mxu0 0.0
    %251 = vmatprep.subr.mxu0 0.0
    %252 = vmatpush1.msra.mxu0 0.0
    %253 = vmatprep.subr.mxu0 0.0
    %254 = vmatpush1.msra.mxu0 0.0
    %255 = vmatprep.subr.mxu0 0.0
    %256 = vmatpush1.msra.mxu0 0.0
    %257 = vmatprep.subr.mxu0 0.0
    %258 = vmatpush1.msra.mxu0 0.0
    %259 = vmatprep.subr.mxu0 0.0
    %260 = vmatpush1.msra.mxu0 0.0
    %261 = vmatprep.subr.mxu0 0.0
    %262 = vmatpush1.msra.mxu0 0.0
    %263 = vmatprep.subr.mxu0 0.0
    %264 = vmatpush1.msra.mxu0 0.0
    %265 = vmatprep.subr.mxu0 0.0
    %266 = vmatpush1.msra.mxu0 0.0
    %267 = vmatprep.subr.mxu0 0.0
    %268 = vmatpush1.msra.mxu0 0.0
    %269 = vmatprep.subr.mxu0 0.0
    %270 = vmatpush1.msra.mxu0 0.0
    %271 = vmatprep.subr.mxu0 0.0
    %272 = vmatpush1.msra.mxu0 0.0
    %273 = vmatprep.subr.mxu0 0.0
    %274 = vmatpush1.msra.mxu0 0.0
    %275 = vmatprep.subr.mxu0 0.0
    %276 = vmatpush1.msra.mxu0 0.0
    %277 = vmatprep.subr.mxu0 0.0
    %278 = vmatpush1.msra.mxu0 0.0
    %279 = vmatprep.mubr.f32.mxu0 0.0
    %280 = vmatmul.mubr.f32.gmra.mrb[0].mxu0 %v207
    %v281 = vpop.f32.mrb[0].mxu0
    %v282 = vadd.f32 %v213, %v281
    %v283 = vpop.f32.mrb[0].mxu0
    %284 = vdwg.mxu0
    %285 = vst [vmem:[#allocation2] sm:$0xff] %v282
    // Predicated region
    $region26: #{noisy_linear.1} parent=1 // pred_check
      _
    $region27: #{noisy_linear.1} parent=1 // pred_check_branch
      %287 = sbr.rel (0) target = $region29
    $region28: #{noisy_linear.1} parent=1 // pred_region
      %s289 = ssub.s32 128, 128
      %290 = vsyncadd [#allocation3], %s289
      %s292 = sshll.u32 [#allocation2], 4
      %s293 = int_to_ptr.vmem [resolvable:$true] %s292
      %295 = dma.vmem_to_hbm [thread:$0]  %s293, 128, %s6, [#allocation3]
    $region29: #{noisy_linear.1} parent=1 // pred_fallthru
      _
    // Predicated region
    $region30: #{noisy_linear.1} parent=1 // pred_check
      _
    $region31: #{noisy_linear.1} parent=1 // pred_check_branch
      %297 = sbr.rel (0) target = $region33
    $region32: #{noisy_linear.1} parent=1 // pred_region
      %298 = dma.done [#allocation3], 128
    $region33: #{noisy_linear.1} parent=1 // pred_fallthru
      _
    %299 = vsyncpa [#allocation3], 1

</llo_original>
